<compile_context>
chip_gen: v7x
topology: tpu7x:2x2x1
jax: 0.10.0
libtpu: 0.0.40
codegen_flags: <defaults>
</compile_context>

<pallas_src>
import jax
import jax.numpy as jnp
from jax.experimental import pallas as pl
from jax.experimental.pallas import tpu as pltpu


def _round_up(x, m):
    return (x + m - 1) // m * m


def _outconv_vpu_kernel(x_ref, w_ref, b_ref, o_ref):
    """Small-channel path: VPU broadcast-MAC, params in SMEM.

    x_ref: (Cin, T) VMEM pixel tile (T multiple of 128)
    w_ref: (Cout, Cin) SMEM ; b_ref: (Cout,) SMEM ; o_ref: (Cout, T) VMEM
    """
    cout, cin = w_ref.shape
    x = x_ref[...].astype(jnp.float32)                 # (Cin, T)
    for o in range(cout):
        acc = x[0:1, :] * w_ref[o, 0]
        for c in range(1, cin):
            acc = acc + x[c:c + 1, :] * w_ref[o, c]
        o_ref[o:o + 1, :] = (acc + b_ref[o]).astype(o_ref.dtype)


def _outconv_mxu_kernel(x_ref, w_ref, b_ref, o_ref):
    """Large-channel path: (Cout,Cin) @ (Cin,T) on the MXU, f32 accumulate.

    x_ref: (Cin, T) VMEM ; w_ref: (Cout, Cin) VMEM ; b_ref: (Cout, 1) VMEM
    """
    acc = jnp.dot(w_ref[...], x_ref[...].astype(w_ref.dtype),
                  preferred_element_type=jnp.float32)
    o_ref[...] = (acc + b_ref[...].astype(jnp.float32)).astype(o_ref.dtype)


def out_conv(x_nchw, weight, bias, *, target_tile=2048):
    """1x1 conv, NCHW in / NCHW out. weight: (Cout,Cin,1,1); bias: (Cout,)."""
    N, Cin, H, W = x_nchw.shape
    Cout = weight.shape[0]
    HW = H * W
    out_dtype = x_nchw.dtype

    # Free reshape (collapse trailing spatial dims): no transposes.
    x = x_nchw.reshape(N, Cin, HW)
    w2d = weight.reshape(Cout, Cin).astype(jnp.float32)
    b1d = bias.astype(jnp.float32)

    # Pad pixel axis to a lane multiple (128) only when needed (ragged H*W).
    HWp = _round_up(HW, 128)
    if HWp != HW:
        x = jnp.pad(x, ((0, 0), (0, 0), (0, HWp - HW)))

    # Pixel tile: big enough to amortize ~0.35us/step overhead, small enough
    # that double-buffered in+out tiles comfortably fit VMEM on every
    # generation (v7x: 64 MiB physical / 32 MiB default scoped).
    itemsize = jnp.dtype(out_dtype).itemsize
    vmem_budget = 24 * 1024 * 1024                 # conservative working set
    bytes_per_col = (Cin + Cout) * itemsize * 2    # double-buffered in + out
    max_tile = max(128, (vmem_budget // bytes_per_col) // 128 * 128)
    tile = min(HWp, _round_up(target_tile, 128), max_tile)
    grid = (N, pl.cdiv(HWp, tile))                 # both axes independent

    x_spec = pl.BlockSpec((None, Cin, tile), lambda n, j: (n, 0, j))
    o_spec = pl.BlockSpec((None, Cout, tile), lambda n, j: (n, 0, j))

    if Cin <= 16 and Cout <= 16:
        # UNet-head sized channels: skip the MXU entirely (VPU MAC, SMEM params).
        kernel = _outconv_vpu_kernel
        w_arg, b_arg = w2d, b1d
        w_spec = pl.BlockSpec(memory_space=pltpu.MemorySpace.SMEM)
        b_spec = pl.BlockSpec(memory_space=pltpu.MemorySpace.SMEM)
    else:
        kernel = _outconv_mxu_kernel
        w_arg, b_arg = w2d, b1d.reshape(Cout, 1)
        w_spec = pl.BlockSpec((Cout, Cin), lambda n, j: (0, 0))
        b_spec = pl.BlockSpec((Cout, 1), lambda n, j: (0, 0))

    y = pl.pallas_call(
        kernel,
        out_shape=jax.ShapeDtypeStruct((N, Cout, HWp), out_dtype),
        grid=grid,
        in_specs=[x_spec, w_spec, b_spec],
        out_specs=o_spec,
        compiler_params=pltpu.CompilerParams(
            dimension_semantics=("parallel", "parallel"),
            vmem_limit_bytes=48 * 1024 * 1024),
    )(x, w_arg, b_arg)

    # Drop pixel padding (no-op when HWp == HW) and restore NCHW.
    return y[:, :, :HW].reshape(N, Cout, H, W)


if __name__ == "__main__":
    key = jax.random.PRNGKey(0)
    k_x, k_w, k_b = jax.random.split(key, 3)

    N, Cin, Cout, H, W = 2, 4, 3, 16, 16

    x = jax.random.normal(k_x, (N, Cin, H, W), dtype=jnp.float32)
    # PyTorch Conv2d default init: U(+/- 1/sqrt(fan_in)), fan_in = Cin*1*1.
    bound = 1.0 / (Cin ** 0.5)
    weight = jax.random.uniform(k_w, (Cout, Cin, 1, 1), jnp.float32,
                                minval=-bound, maxval=bound)
    bias = jax.random.uniform(k_b, (Cout,), jnp.float32,
                              minval=-bound, maxval=bound)

    def ref(xx):
        return (jnp.einsum("nchw,oc->nohw", xx, weight.reshape(Cout, Cin))
                + bias.reshape(1, Cout, 1, 1))

    y = out_conv(x, weight, bias)
    jax.block_until_ready(y)
    assert y.shape == (N, Cout, H, W)
    assert jnp.allclose(y, ref(x), atol=1e-5), "mismatch vs reference"

    # Ragged spatial size exercises the pixel-axis padding path (H*W % 128 != 0).
    Hr = Wr = 10
    xr = jax.random.normal(k_x, (N, Cin, Hr, Wr), dtype=jnp.float32)
    yr = out_conv(xr, weight, bias)
    jax.block_until_ready(yr)
    assert yr.shape == (N, Cout, Hr, Wr)
    assert jnp.allclose(yr, ref(xr), atol=1e-5), "mismatch vs reference (ragged)"

    print("KERNEL_OK")
</pallas_src>

<mosaic_0001>
module attributes {stable_mosaic.version = 11 : i64} {
  func.func @_outconv_vpu_kernel(%arg0: i32, %arg1: i32, %arg2: memref<1x4x256xf32, #tpu.memory_space<vmem>>, %arg3: memref<3x4xf32, #tpu.memory_space<smem>>, %arg4: memref<3xf32, #tpu.memory_space<smem>>, %arg5: memref<1x3x256xf32, #tpu.memory_space<vmem>>) attributes {dimension_semantics = [#tpu.dimension_semantics<parallel>, #tpu.dimension_semantics<parallel>], iteration_bounds = array<i64: 2, 1>, scalar_prefetch = 0 : i64, scratch_operands = 0 : i64, tpu.core_type = #tpu.core_type<tc>, window_params = [{transform_indices = @transform_0, window_bounds = array<i64: 1, 4, 256>}, {transform_indices = @transform_1, window_bounds = array<i64: 3, 4>}, {transform_indices = @transform_2, window_bounds = array<i64: 3>}, {transform_indices = @transform_3, window_bounds = array<i64: 1, 3, 256>}]} {
    %c0 = arith.constant 0 : index
    %c0_0 = arith.constant 0 : index
    %c0_1 = arith.constant 0 : index
    %0 = vector.load %arg2[%c0, %c0_0, %c0_1] : memref<1x4x256xf32, #tpu.memory_space<vmem>>, vector<1x4x256xf32>
    %1 = vector.shape_cast %0 : vector<1x4x256xf32> to vector<4x256xf32>
    %2 = vector.extract_strided_slice %1 {offsets = [0, 0], sizes = [1, 256], strides = [1, 1]} : vector<4x256xf32> to vector<1x256xf32>
    %c0_2 = arith.constant 0 : index
    %c0_3 = arith.constant 0 : index
    %3 = memref.load %arg3[%c0_2, %c0_3] : memref<3x4xf32, #tpu.memory_space<smem>>
    %4 = vector.broadcast %3 : f32 to vector<1x256xf32>
    %5 = arith.mulf %2, %4 : vector<1x256xf32>
    %6 = vector.extract_strided_slice %1 {offsets = [1, 0], sizes = [1, 256], strides = [1, 1]} : vector<4x256xf32> to vector<1x256xf32>
    %c0_4 = arith.constant 0 : index
    %c1 = arith.constant 1 : index
    %7 = memref.load %arg3[%c0_4, %c1] : memref<3x4xf32, #tpu.memory_space<smem>>
    %8 = vector.broadcast %7 : f32 to vector<1x256xf32>
    %9 = arith.mulf %6, %8 : vector<1x256xf32>
    %10 = arith.addf %5, %9 : vector<1x256xf32>
    %11 = vector.extract_strided_slice %1 {offsets = [2, 0], sizes = [1, 256], strides = [1, 1]} : vector<4x256xf32> to vector<1x256xf32>
    %c0_5 = arith.constant 0 : index
    %c2 = arith.constant 2 : index
    %12 = memref.load %arg3[%c0_5, %c2] : memref<3x4xf32, #tpu.memory_space<smem>>
    %13 = vector.broadcast %12 : f32 to vector<1x256xf32>
    %14 = arith.mulf %11, %13 : vector<1x256xf32>
    %15 = arith.addf %10, %14 : vector<1x256xf32>
    %16 = vector.extract_strided_slice %1 {offsets = [3, 0], sizes = [1, 256], strides = [1, 1]} : vector<4x256xf32> to vector<1x256xf32>
    %c0_6 = arith.constant 0 : index
    %c3 = arith.constant 3 : index
    %17 = memref.load %arg3[%c0_6, %c3] : memref<3x4xf32, #tpu.memory_space<smem>>
    %18 = vector.broadcast %17 : f32 to vector<1x256xf32>
    %19 = arith.mulf %16, %18 : vector<1x256xf32>
    %20 = arith.addf %15, %19 : vector<1x256xf32>
    %c0_7 = arith.constant 0 : index
    %21 = memref.load %arg4[%c0_7] : memref<3xf32, #tpu.memory_space<smem>>
    %22 = vector.broadcast %21 : f32 to vector<1x256xf32>
    %23 = arith.addf %20, %22 : vector<1x256xf32>
    %c0_8 = arith.constant 0 : index
    %c0_9 = arith.constant 0 : index
    %c0_10 = arith.constant 0 : index
    %24 = vector.load %arg5[%c0_8, %c0_9, %c0_10] : memref<1x3x256xf32, #tpu.memory_space<vmem>>, vector<1x1x256xf32>
    %25 = vector.shape_cast %24 : vector<1x1x256xf32> to vector<1x256xf32>
    %26 = vector.shape_cast %23 : vector<1x256xf32> to vector<1x1x256xf32>
    tpu.vector_store %arg5[%c0_8, %c0_9, %c0_10], %26 {strides = array<i32>} : memref<1x3x256xf32, #tpu.memory_space<vmem>>, vector<1x1x256xf32>,
    %27 = vector.extract_strided_slice %1 {offsets = [0, 0], sizes = [1, 256], strides = [1, 1]} : vector<4x256xf32> to vector<1x256xf32>
    %c1_11 = arith.constant 1 : index
    %c0_12 = arith.constant 0 : index
    %28 = memref.load %arg3[%c1_11, %c0_12] : memref<3x4xf32, #tpu.memory_space<smem>>
    %29 = vector.broadcast %28 : f32 to vector<1x256xf32>
    %30 = arith.mulf %27, %29 : vector<1x256xf32>
    %31 = vector.extract_strided_slice %1 {offsets = [1, 0], sizes = [1, 256], strides = [1, 1]} : vector<4x256xf32> to vector<1x256xf32>
    %c1_13 = arith.constant 1 : index
    %c1_14 = arith.constant 1 : index
    %32 = memref.load %arg3[%c1_13, %c1_14] : memref<3x4xf32, #tpu.memory_space<smem>>
    %33 = vector.broadcast %32 : f32 to vector<1x256xf32>
    %34 = arith.mulf %31, %33 : vector<1x256xf32>
    %35 = arith.addf %30, %34 : vector<1x256xf32>
    %36 = vector.extract_strided_slice %1 {offsets = [2, 0], sizes = [1, 256], strides = [1, 1]} : vector<4x256xf32> to vector<1x256xf32>
    %c1_15 = arith.constant 1 : index
    %c2_16 = arith.constant 2 : index
    %37 = memref.load %arg3[%c1_15, %c2_16] : memref<3x4xf32, #tpu.memory_space<smem>>
    %38 = vector.broadcast %37 : f32 to vector<1x256xf32>
    %39 = arith.mulf %36, %38 : vector<1x256xf32>
    %40 = arith.addf %35, %39 : vector<1x256xf32>
    %41 = vector.extract_strided_slice %1 {offsets = [3, 0], sizes = [1, 256], strides = [1, 1]} : vector<4x256xf32> to vector<1x256xf32>
    %c1_17 = arith.constant 1 : index
    %c3_18 = arith.constant 3 : index
    %42 = memref.load %arg3[%c1_17, %c3_18] : memref<3x4xf32, #tpu.memory_space<smem>>
    %43 = vector.broadcast %42 : f32 to vector<1x256xf32>
    %44 = arith.mulf %41, %43 : vector<1x256xf32>
    %45 = arith.addf %40, %44 : vector<1x256xf32>
    %c1_19 = arith.constant 1 : index
    %46 = memref.load %arg4[%c1_19] : memref<3xf32, #tpu.memory_space<smem>>
    %47 = vector.broadcast %46 : f32 to vector<1x256xf32>
    %48 = arith.addf %45, %47 : vector<1x256xf32>
    %c0_20 = arith.constant 0 : index
    %c1_21 = arith.constant 1 : index
    %c0_22 = arith.constant 0 : index
    %49 = vector.load %arg5[%c0_20, %c1_21, %c0_22] : memref<1x3x256xf32, #tpu.memory_space<vmem>>, vector<1x1x256xf32>
    %50 = vector.shape_cast %49 : vector<1x1x256xf32> to vector<1x256xf32>
    %51 = vector.shape_cast %48 : vector<1x256xf32> to vector<1x1x256xf32>
    tpu.vector_store %arg5[%c0_20, %c1_21, %c0_22], %51 {strides = array<i32>} : memref<1x3x256xf32, #tpu.memory_space<vmem>>, vector<1x1x256xf32>,
    %52 = vector.extract_strided_slice %1 {offsets = [0, 0], sizes = [1, 256], strides = [1, 1]} : vector<4x256xf32> to vector<1x256xf32>
    %c2_23 = arith.constant 2 : index
    %c0_24 = arith.constant 0 : index
    %53 = memref.load %arg3[%c2_23, %c0_24] : memref<3x4xf32, #tpu.memory_space<smem>>
    %54 = vector.broadcast %53 : f32 to vector<1x256xf32>
    %55 = arith.mulf %52, %54 : vector<1x256xf32>
    %56 = vector.extract_strided_slice %1 {offsets = [1, 0], sizes = [1, 256], strides = [1, 1]} : vector<4x256xf32> to vector<1x256xf32>
    %c2_25 = arith.constant 2 : index
    %c1_26 = arith.constant 1 : index
    %57 = memref.load %arg3[%c2_25, %c1_26] : memref<3x4xf32, #tpu.memory_space<smem>>
    %58 = vector.broadcast %57 : f32 to vector<1x256xf32>
    %59 = arith.mulf %56, %58 : vector<1x256xf32>
    %60 = arith.addf %55, %59 : vector<1x256xf32>
    %61 = vector.extract_strided_slice %1 {offsets = [2, 0], sizes = [1, 256], strides = [1, 1]} : vector<4x256xf32> to vector<1x256xf32>
    %c2_27 = arith.constant 2 : index
    %c2_28 = arith.constant 2 : index
    %62 = memref.load %arg3[%c2_27, %c2_28] : memref<3x4xf32, #tpu.memory_space<smem>>
    %63 = vector.broadcast %62 : f32 to vector<1x256xf32>
    %64 = arith.mulf %61, %63 : vector<1x256xf32>
    %65 = arith.addf %60, %64 : vector<1x256xf32>
    %66 = vector.extract_strided_slice %1 {offsets = [3, 0], sizes = [1, 256], strides = [1, 1]} : vector<4x256xf32> to vector<1x256xf32>
    %c2_29 = arith.constant 2 : index
    %c3_30 = arith.constant 3 : index
    %67 = memref.load %arg3[%c2_29, %c3_30] : memref<3x4xf32, #tpu.memory_space<smem>>
    %68 = vector.broadcast %67 : f32 to vector<1x256xf32>
    %69 = arith.mulf %66, %68 : vector<1x256xf32>
    %70 = arith.addf %65, %69 : vector<1x256xf32>
    %c2_31 = arith.constant 2 : index
    %71 = memref.load %arg4[%c2_31] : memref<3xf32, #tpu.memory_space<smem>>
    %72 = vector.broadcast %71 : f32 to vector<1x256xf32>
    %73 = arith.addf %70, %72 : vector<1x256xf32>
    %c0_32 = arith.constant 0 : index
    %c2_33 = arith.constant 2 : index
    %c0_34 = arith.constant 0 : index
    %74 = vector.load %arg5[%c0_32, %c2_33, %c0_34] : memref<1x3x256xf32, #tpu.memory_space<vmem>>, vector<1x1x256xf32>
    %75 = vector.shape_cast %74 : vector<1x1x256xf32> to vector<1x256xf32>
    %76 = vector.shape_cast %73 : vector<1x256xf32> to vector<1x1x256xf32>
    tpu.vector_store %arg5[%c0_32, %c2_33, %c0_34], %76 {strides = array<i32>} : memref<1x3x256xf32, #tpu.memory_space<vmem>>, vector<1x1x256xf32>,
    return
  }
  func.func @transform_0(%arg0: i32, %arg1: i32) -> (i32, i32, i32) {
    %c0_i32 = arith.constant 0 : i32
    %c0_i32_0 = arith.constant 0 : i32
    return %arg0, %c0_i32, %arg1 : i32, i32, i32
  }
  func.func @transform_1(%arg0: i32, %arg1: i32) -> (i32, i32) {
    %c0_i32 = arith.constant 0 : i32
    %c0_i32_0 = arith.constant 0 : i32
    %c0_i32_1 = arith.constant 0 : i32
    return %c0_i32, %c0_i32_0 : i32, i32
  }
  func.func @transform_2(%arg0: i32, %arg1: i32) -> i32 {
    %c0_i32 = arith.constant 0 : i32
    %c0_i32_0 = arith.constant 0 : i32
    return %c0_i32 : i32
  }
  func.func @transform_3(%arg0: i32, %arg1: i32) -> (i32, i32, i32) {
    %c0_i32 = arith.constant 0 : i32
    %c0_i32_0 = arith.constant 0 : i32
    return %arg0, %c0_i32, %arg1 : i32, i32, i32
  }
}

</mosaic_0001>

<llo_original>
// kernel: tpu_custom_call.1
$region0: #{tpu_custom_call.1}
  #allocation0 [shape = 'u32[]', space=smem, size = 0x4, offset = 0x4, fixed_abs, tag = 'smem constant byte address 0x4 - core index']
  #allocation1 [shape = 'u32[144,128]{1,0:T(1,128)}', space=vmem, size = 0x12000, scoped, tag = 'internal scratch']
  %s0 = inlined_call_operand.hbm [shape: f32[2,4,256], index: 0, kind: input, shape index: {}]
  %s1 = inlined_call_operand.hbm [shape: f32[3,4], index: 1, kind: input, shape index: {}]
  %s2 = inlined_call_operand.vmem [shape: f32[3], index: 2, kind: input, shape index: {}]
  %s3 = inlined_call_operand.vmem [shape: f32[2,3,256], index: 3, kind: output, shape index: {}]
  %s4 = sld [smem:[#allocation0]]
  $region57: #{tpu_custom_call.1} parent=0
    _
  %s6 = ssub.s32 1, %s4
  %s7 = scalar_select 0, %s6, %s4
  $region1: #{tpu_custom_call.1} parent=0
    #allocation2 [shape = 'u8[8192]{0}', space=vmem, size = 0x2000, scoped, tag = 'input window, operand 0']
    #allocation3 [shape = 's32[2]{0}', space=sflag, size = 0x8, scoped, tag = 'scoped memory for tpu_custom_call.1']
    #allocation4 [shape = 's32[2]{0}', space=sflag, size = 0x8, scoped, tag = 'scoped memory for tpu_custom_call.1']
    #allocation5 [shape = 's32[2]{0}', space=sflag, size = 0x8, scoped, tag = 'scoped memory for tpu_custom_call.1']
    #allocation6 [shape = 'u8[2048]{0}', space=smem, size = 0x800, scoped, tag = 'input window, operand 1, single buffered']
    #allocation7 [shape = 'u8[512]{0}', space=smem, size = 0x200, scoped, tag = 'input window, operand 2, single buffered']
    %8 = vsyncpa [#allocation3], 0
    %s9 = scalar_lea.sflag [#allocation3], 1
    %10 = vsyncpa %s9, 0
    %11 = vsyncpa [#allocation4], 0
    %12 = vsyncpa [#allocation5], 0
    loop: start=0, step=1, limit=4
    $region2: #{tpu_custom_call.1} parent=1 // loop_pre_header
      _
    $region3: #{tpu_custom_call.1} parent=1 // loop_header
      %s14 = sphi 0, %s18
      %p15 = scmp.ge.s32.totalorder %s14, 4
      %s21 = sphi 0, %s33
      %s22 = sphi 0, %s29
      %s23 = sphi 0, %s21
      %s24 = sphi 0, %s22
      %s25 = sphi 0, %s23
      %s26 = sphi 0, %s24
      %s38 = sphi 0, %s40
      %s41 = sphi 0, %s38
      %s42 = sphi 0, %s41
      %s58 = sphi 0, %s42
      %s62 = sphi 0, %s62
      %s64 = sphi 0, %s62
      %s65 = sphi 0, %s64
      %s79 = sphi 0, %s65
      %s83 = sphi 0, %s83
      %s85 = sphi 0, %s83
      %s86 = sphi 0, %s85
      %s100 = sphi 0, %s86
      %s108 = sphi 0, %s110
      %s111 = sphi 0, %s108
      %s112 = sphi 0, %s111
      %s128 = sphi 0, %s112
    $region4: #{tpu_custom_call.1} parent=1 // loop_header_branch
      %17 = sbr.rel (%p15) target = $region8
    $region5: #{tpu_custom_call.1} parent=1 // loop_body
      %s19 = ssub.s32 %s14, 1
      %s20 = ssub.s32 %s14, 2
      %s27 = sadd.s32 1, %s22
      %p28 = scmp.ge.s32.totalorder %s27, 1
      %s29 = scalar_select %p28, 0, %s27
      %s30 = sadd.s32 1, %s21
      %s31 = scalar_select %p28, %s30, %s21
      %p32 = scmp.ge.s32.totalorder %s31, 2
      %s33 = scalar_select %p32, 0, %s31
      %s34 = ssub.s32 %s21, %s33
      %s35 = ssub.s32 %s22, %s29
      %s36 = sor.u32 %s34, %s35
      %p37 = scmp.eq.s32.totalorder %s36, 0
      %s39 = sadd.s32 %s38, 1
      %s40 = scalar_select %p37, %s38, %s39
      %p43 = pneg %p37
      %p44 = scmp.eq.s32.totalorder %s14, 1
      %p45 = por %p43, %p44
      %p46 = scmp.ne.s32.totalorder %s38, %s41
      %p47 = scmp.eq.s32.totalorder %s14, 0
      %p48 = por %p46, %p47
      %p49 = scmp.ne.s32.totalorder %s38, %s41
      %p50 = scmp.eq.s32.totalorder %s19, 1
      %p51 = por %p49, %p50
      %p52 = scmp.ne.s32.totalorder %s41, %s42
      %p53 = scmp.eq.s32.totalorder %s19, 0
      %p54 = por %p52, %p53
      %p55 = scmp.ne.s32.totalorder %s41, %s42
      %p56 = scmp.eq.s32.totalorder %s20, 1
      %p57 = por %p55, %p56
      %p59 = scmp.ne.s32.totalorder %s42, %s58
      %p60 = scmp.eq.s32.totalorder %s20, 0
      %p61 = por %p59, %p60
      %s63 = sadd.s32 %s62, 1
      %p66 = scmp.eq.s32.totalorder %s14, 1
      %p67 = scmp.ne.s32.totalorder %s62, %s64
      %p68 = scmp.eq.s32.totalorder %s14, 0
      %p69 = por %p67, %p68
      %p70 = scmp.ne.s32.totalorder %s62, %s64
      %p71 = scmp.eq.s32.totalorder %s19, 1
      %p72 = por %p70, %p71
      %p73 = scmp.ne.s32.totalorder %s64, %s65
      %p74 = scmp.eq.s32.totalorder %s19, 0
      %p75 = por %p73, %p74
      %p76 = scmp.ne.s32.totalorder %s64, %s65
      %p77 = scmp.eq.s32.totalorder %s20, 1
      %p78 = por %p76, %p77
      %p80 = scmp.ne.s32.totalorder %s65, %s79
      %p81 = scmp.eq.s32.totalorder %s20, 0
      %p82 = por %p80, %p81
      %s84 = sadd.s32 %s83, 1
      %p87 = scmp.eq.s32.totalorder %s14, 1
      %p88 = scmp.ne.s32.totalorder %s83, %s85
      %p89 = scmp.eq.s32.totalorder %s14, 0
      %p90 = por %p88, %p89
      %p91 = scmp.ne.s32.totalorder %s83, %s85
      %p92 = scmp.eq.s32.totalorder %s19, 1
      %p93 = por %p91, %p92
      %p94 = scmp.ne.s32.totalorder %s85, %s86
      %p95 = scmp.eq.s32.totalorder %s19, 0
      %p96 = por %p94, %p95
      %p97 = scmp.ne.s32.totalorder %s85, %s86
      %p98 = scmp.eq.s32.totalorder %s20, 1
      %p99 = por %p97, %p98
      %p101 = scmp.ne.s32.totalorder %s86, %s100
      %p102 = scmp.eq.s32.totalorder %s20, 0
      %p103 = por %p101, %p102
      %s104 = ssub.s32 %s21, %s33
      %s105 = ssub.s32 %s22, %s29
      %s106 = sor.u32 %s104, %s105
      %p107 = scmp.eq.s32.totalorder %s106, 0
      %s109 = sadd.s32 %s108, 1
      %s110 = scalar_select %p107, %s108, %s109
      %p113 = pneg %p107
      %p114 = scmp.eq.s32.totalorder %s14, 1
      %p115 = por %p113, %p114
      %p116 = scmp.ne.s32.totalorder %s108, %s111
      %p117 = scmp.eq.s32.totalorder %s14, 0
      %p118 = por %p116, %p117
      %p119 = scmp.ne.s32.totalorder %s108, %s111
      %p120 = scmp.eq.s32.totalorder %s19, 1
      %p121 = por %p119, %p120
      %p122 = scmp.ne.s32.totalorder %s111, %s112
      %p123 = scmp.eq.s32.totalorder %s19, 0
      %p124 = por %p122, %p123
      %p125 = scmp.ne.s32.totalorder %s111, %s112
      %p126 = scmp.eq.s32.totalorder %s20, 1
      %p127 = por %p125, %p126
      %p129 = scmp.ne.s32.totalorder %s112, %s128
      %p130 = scmp.eq.s32.totalorder %s20, 0
      %p131 = por %p129, %p130
      %p132 = scmp.le.s32.totalorder 1, %s14
      %p133 = scmp.lt.s32.totalorder %s14, 3
      %p134 = pnand %p132, %p133
      %p135 = pneg %p134
      // Predicated region
      $region9: #{tpu_custom_call.1} parent=5 // pred_check
        _
      $region10: #{tpu_custom_call.1} parent=5 // pred_check_branch
        %137 = sbr.rel (%p134) target = $region12
      $region11: #{tpu_custom_call.1} parent=5 // pred_region
        %s138 = ssub.s32 %s14, 1
        // Predicated region
        $region13: #{tpu_custom_call.1} parent=11 // pred_check
          %p139 = pneg %p75
        $region14: #{tpu_custom_call.1} parent=11 // pred_check_branch
          %141 = sbr.rel (%p139) target = $region16
        $region15: #{tpu_custom_call.1} parent=11 // pred_region
          %s143 = ssub.s32 64, 64
          %144 = vsyncadd [#allocation4], %s143
          %147 = dma.hbm_to_smem %s1, 64, [#allocation6], [#allocation4]
        $region16: #{tpu_custom_call.1} parent=11 // pred_fallthru
          _
        // Predicated region
        $region17: #{tpu_custom_call.1} parent=11 // pred_check
          %p148 = pneg %p96
        $region18: #{tpu_custom_call.1} parent=11 // pred_check_branch
          %150 = sbr.rel (%p148) target = $region20
        $region19: #{tpu_custom_call.1} parent=11 // pred_region
          %s152 = ssub.s32 16, 16
          %153 = vsyncadd [#allocation5], %s152
          %s155 = sshll.u32 %s2, 4
          %s156 = int_to_ptr.vmem [resolvable:$true] %s155
          %158 = dma.vmem_to_smem %s156, 16, [#allocation7], [#allocation5]
        $region20: #{tpu_custom_call.1} parent=11 // pred_fallthru
          _
      $region12: #{tpu_custom_call.1} parent=5 // pred_fallthru
        _
      %p159 = scmp.lt.s32.totalorder %s14, 2
      // Predicated region
      $region21: #{tpu_custom_call.1} parent=5 // pred_check
        %p160 = pneg %p159
      $region22: #{tpu_custom_call.1} parent=5 // pred_check_branch
        %162 = sbr.rel (%p160) target = $region24
      $region23: #{tpu_custom_call.1} parent=5 // pred_region
        // Predicated region
        $region25: #{tpu_custom_call.1} parent=23 // pred_check
          %p163 = pneg %p48
        $region26: #{tpu_custom_call.1} parent=23 // pred_check_branch
          %165 = sbr.rel (%p163) target = $region28
        $region27: #{tpu_custom_call.1} parent=23 // pred_region
          %s166 = sand.u32 %s38, 1
          %s167 = scalar_lea.sflag [#allocation3], %s166
          %s168 = sand.u32 %s38, 1
          %s169 = smul.addr %s168, 8
          %s170 = scalar_lea.vmem [#allocation2], %s169
          %s171 = smul.u32 2, %s22
          %s173 = ssub.s32 128, 128
          %174 = vsyncadd %s167, %s173
          %s175 = smul.addr %s21, 2
          %s176 = sadd.s32 %s171, %s175
          %s177 = smul.addr %s176, 64
          %s178 = scalar_lea.hbm %s0, %s177
          %s180 = sshll.u32 %s170, 4
          %s181 = int_to_ptr.vmem [resolvable:$true] %s180
          %183 = dma.hbm_to_vmem [thread:$0]  %s178, 128, %s181, %s167
        $region28: #{tpu_custom_call.1} parent=23 // pred_fallthru
          _
      $region24: #{tpu_custom_call.1} parent=5 // pred_fallthru
        _
      %p184 = scmp.le.s32.totalorder 1, %s14
      %p185 = scmp.lt.s32.totalorder %s14, 3
      %p186 = pnand %p184, %p185
      %p187 = pneg %p186
      // Predicated region
      $region29: #{tpu_custom_call.1} parent=5 // pred_check
        _
      $region30: #{tpu_custom_call.1} parent=5 // pred_check_branch
        %189 = sbr.rel (%p186) target = $region32
      $region31: #{tpu_custom_call.1} parent=5 // pred_region
        %s190 = ssub.s32 %s14, 1
        %s191 = sand.u32 %s41, 1
        %s192 = scalar_lea.sflag [#allocation3], %s191
        %s193 = sand.u32 %s41, 1
        %s194 = smul.addr %s193, 8
        %s195 = scalar_lea.vmem [#allocation2], %s194
        // Predicated region
        $region33: #{tpu_custom_call.1} parent=31 // pred_check
          %p196 = pneg %p54
        $region34: #{tpu_custom_call.1} parent=31 // pred_check_branch
          %198 = sbr.rel (%p196) target = $region36
        $region35: #{tpu_custom_call.1} parent=31 // pred_region
          %199 = dma.done %s192, 128
        $region36: #{tpu_custom_call.1} parent=31 // pred_fallthru
          _
        // Predicated region
        $region37: #{tpu_custom_call.1} parent=31 // pred_check
          %p200 = pneg %p75
        $region38: #{tpu_custom_call.1} parent=31 // pred_check_branch
          %202 = sbr.rel (%p200) target = $region40
        $region39: #{tpu_custom_call.1} parent=31 // pred_region
          %203 = dma.done [#allocation4], 64
        $region40: #{tpu_custom_call.1} parent=31 // pred_fallthru
          _
        // Predicated region
        $region41: #{tpu_custom_call.1} parent=31 // pred_check
          %p204 = pneg %p96
        $region42: #{tpu_custom_call.1} parent=31 // pred_check_branch
          %206 = sbr.rel (%p204) target = $region44
        $region43: #{tpu_custom_call.1} parent=31 // pred_region
          %207 = dma.done [#allocation5], 16
        $region44: #{tpu_custom_call.1} parent=31 // pred_fallthru
          _
        %208 = sfence
        %s209 = sand.u32 %s41, 1
        %s210 = scalar_lea.sflag [#allocation3], %s209
        %s211 = sand.u32 %s41, 1
        %s212 = smul.addr %s211, 8
        %s213 = scalar_lea.vmem [#allocation2], %s212
        %p214 = pneg %p54
        %p215 = pneg %p51
        %p216 = pneg %p75
        %p217 = pneg %p72
        %p218 = pneg %p96
        %p219 = pneg %p93
        %p220 = pneg %p124
        %p221 = pneg %p121
        %s222 = smul.u32 2, %s24
        %p223 = scmp.lt.s32.totalorder %s23, 1
        %s224 = scalar_select %p223, %s23, 1
        %p225 = scmp.lt.s32.totalorder %s222, 1
        %s226 = scalar_select %p225, %s222, 1
        %s227 = smul.addr %s224, 2
        %s228 = sadd.s32 %s226, %s227
        %s229 = smul.addr %s228, 4
        %s230 = scalar_lea.vmem %s3, %s229
        %s231 = smul.u32 2, %s24
        %s232 = smul.u32 2, %s24
        %p233 = scmp.lt.s32.totalorder %s23, 1
        %s234 = scalar_select %p233, %s23, 1
        %p235 = scmp.lt.s32.totalorder %s232, 1
        %s236 = scalar_select %p235, %s232, 1
        %s237 = smul.addr %s234, 2
        %s238 = sadd.s32 %s236, %s237
        %s239 = smul.addr %s238, 4
        %s240 = scalar_lea.vmem %s3, %s239
        %s241 = smul.u32 2, %s24
        %v242 = vld [vmem:[%s195] sm:$0xff]
        %s243 = sld [smem:[#allocation6]]
        %v244 = vstv %s243
        %v245 = vmul.f32 %v242, %v244
        %s246 = sld [smem:[#allocation6 + $0x1]]
        %v247 = vstv %s246
        %v248 = vmul.f32 %v242, %v247
        %v250 = vrot.slane %v248, 5
        %v251 = vrot.slane %v250, 4
        %v253 = vadd.f32 %v245, %v251
        %s254 = sld [smem:[#allocation6 + $0x2]]
        %v255 = vstv %s254
        %v256 = vmul.f32 %v242, %v255
        %v258 = vrot.slane %v256, 6
        %v259 = vrot.slane %v258, 4
        %v261 = vadd.f32 %v253, %v259
        %s262 = sld [smem:[#allocation6 + $0x3]]
        %v263 = vstv %s262
        %v264 = vmul.f32 %v242, %v263
        %v266 = vrot.slane %v264, 7
        %v267 = vrot.slane %v266, 4
        %v269 = vadd.f32 %v261, %v267
        %s270 = sld [smem:[#allocation7]]
        %v271 = vstv %s270
        %v272 = vadd.f32 %v269, %v271
        %v275 = vunpack.c.l.s4 1966171168
        %v276 = vunpack.c.0.s8 %v275
        %v277 = vlaneseq
        %v278 = vshrl.u32 %v277, 7
        %v279 = vsub.s32 %v276, %v278
        %v280 = vrot.slane %v272, %v279
        %v282 = vunpack.c.l.s4 1966171168
        %v283 = vunpack.c.0.s8 %v282
        %v284 = vlaneseq
        %v285 = vshrl.u32 %v284, 7
        %v286 = vsub.s32 %v283, %v285
        %v287 = vrot.slane %v280, %v286
        %v289 = vlaneseq
        %vm290 = vcmp.ge.s32.totalorder %v289, 0
        %vm291 = vcmp.lt.s32.totalorder %v289, 256
        %vm292 = vmand %vm290, %vm291
        %293 = vst.msk [vmem:[%s240] ss:$4 sm:$0x3] %vm292, %v287
        %s294 = sld [smem:[#allocation6 + $0x80]]
        %v295 = vstv %s294
        %v296 = vmul.f32 %v242, %v295
        %s297 = sld [smem:[#allocation6 + $0x81]]
        %v298 = vstv %s297
        %v299 = vmul.f32 %v242, %v298
        %v301 = vrot.slane %v299, 5
        %v302 = vrot.slane %v301, 4
        %v304 = vadd.f32 %v296, %v302
        %s305 = sld [smem:[#allocation6 + $0x82]]
        %v306 = vstv %s305
        %v307 = vmul.f32 %v242, %v306
        %v309 = vrot.slane %v307, 6
        %v310 = vrot.slane %v309, 4
        %v312 = vadd.f32 %v304, %v310
        %s313 = sld [smem:[#allocation6 + $0x83]]
        %v314 = vstv %s313
        %v315 = vmul.f32 %v242, %v314
        %v317 = vrot.slane %v315, 7
        %v318 = vrot.slane %v317, 4
        %v320 = vadd.f32 %v312, %v318
        %s321 = sld [smem:[#allocation7 + $0x1]]
        %v322 = vstv %s321
        %v323 = vadd.f32 %v320, %v322
        %v326 = vunpack.c.l.s4 1966171168
        %v327 = vunpack.c.0.s8 %v326
        %v328 = vlaneseq
        %v329 = vshrl.u32 %v328, 7
        %v330 = vsub.s32 %v327, %v329
        %v331 = vrot.slane %v323, %v330
        %v333 = vunpack.c.l.s4 1966171168
        %v334 = vunpack.c.0.s8 %v333
        %v335 = vlaneseq
        %v336 = vshrl.u32 %v335, 7
        %v337 = vsub.s32 %v334, %v336
        %v338 = vrot.slane %v331, %v337
        %s340 = scalar_lea.vmem %s240, 1
        %341 = vst.msk [vmem:[%s340] ss:$4 sm:$0x3] %vm292, %v338
        %s342 = sld [smem:[#allocation6 + $0x100]]
        %v343 = vstv %s342
        %v344 = vmul.f32 %v242, %v343
        %s345 = sld [smem:[#allocation6 + $0x101]]
        %v346 = vstv %s345
        %v347 = vmul.f32 %v242, %v346
        %v349 = vrot.slane %v347, 5
        %v350 = vrot.slane %v349, 4
        %v352 = vadd.f32 %v344, %v350
        %s353 = sld [smem:[#allocation6 + $0x102]]
        %v354 = vstv %s353
        %v355 = vmul.f32 %v242, %v354
        %v357 = vrot.slane %v355, 6
        %v358 = vrot.slane %v357, 4
        %v360 = vadd.f32 %v352, %v358
        %s361 = sld [smem:[#allocation6 + $0x103]]
        %v362 = vstv %s361
        %v363 = vmul.f32 %v242, %v362
        %v365 = vrot.slane %v363, 7
        %v366 = vrot.slane %v365, 4
        %v368 = vadd.f32 %v360, %v366
        %s369 = sld [smem:[#allocation7 + $0x2]]
        %v370 = vstv %s369
        %v371 = vadd.f32 %v368, %v370
        %v374 = vunpack.c.l.s4 1966171168
        %v375 = vunpack.c.0.s8 %v374
        %v376 = vlaneseq
        %v377 = vshrl.u32 %v376, 7
        %v378 = vsub.s32 %v375, %v377
        %v379 = vrot.slane %v371, %v378
        %v381 = vunpack.c.l.s4 1966171168
        %v382 = vunpack.c.0.s8 %v381
        %v383 = vlaneseq
        %v384 = vshrl.u32 %v383, 7
        %v385 = vsub.s32 %v382, %v384
        %v386 = vrot.slane %v379, %v385
        %s388 = scalar_lea.vmem %s240, 2
        %389 = vst.msk [vmem:[%s388] ss:$4 sm:$0x3] %vm292, %v386
        %s390 = smul.u32 2, %s24
        %p391 = scmp.lt.s32.totalorder %s23, 1
        %s392 = scalar_select %p391, %s23, 1
        %p393 = scmp.lt.s32.totalorder %s390, 1
        %s394 = scalar_select %p393, %s390, 1
        %s395 = smul.addr %s392, 2
        %s396 = sadd.s32 %s394, %s395
        %s397 = smul.addr %s396, 4
        %s398 = scalar_lea.vmem %s3, %s397
        // Predicated region
        $region45: #{tpu_custom_call.1} parent=31 // pred_check
          %p399 = pneg %p121
        $region46: #{tpu_custom_call.1} parent=31 // pred_check_branch
          %401 = sbr.rel (%p399) target = $region48
        $region47: #{tpu_custom_call.1} parent=31 // pred_region
          %s402 = smul.u32 2, %s24
        $region48: #{tpu_custom_call.1} parent=31 // pred_fallthru
          _
      $region32: #{tpu_custom_call.1} parent=5 // pred_fallthru
        _
      %p403 = scmp.le.s32.totalorder 2, %s14
      // Predicated region
      $region49: #{tpu_custom_call.1} parent=5 // pred_check
        %p404 = pneg %p403
      $region50: #{tpu_custom_call.1} parent=5 // pred_check_branch
        %406 = sbr.rel (%p404) target = $region52
      $region51: #{tpu_custom_call.1} parent=5 // pred_region
        %s407 = ssub.s32 %s14, 2
        // Predicated region
        $region53: #{tpu_custom_call.1} parent=51 // pred_check
          %p408 = pneg %p127
        $region54: #{tpu_custom_call.1} parent=51 // pred_check_branch
          %410 = sbr.rel (%p408) target = $region56
        $region55: #{tpu_custom_call.1} parent=51 // pred_region
          %s411 = smul.u32 2, %s26
          %p412 = scmp.lt.s32.totalorder %s25, 1
          %s413 = scalar_select %p412, %s25, 1
          %p414 = scmp.lt.s32.totalorder %s411, 1
          %s415 = scalar_select %p414, %s411, 1
          %s416 = smul.addr %s413, 2
          %s417 = sadd.s32 %s415, %s416
          %s418 = smul.addr %s417, 4
          %s419 = scalar_lea.vmem %s3, %s418
        $region56: #{tpu_custom_call.1} parent=51 // pred_fallthru
          _
      $region52: #{tpu_custom_call.1} parent=5 // pred_fallthru
        _
    $region6: #{tpu_custom_call.1} parent=1 // loop_footer
      %s18 = sadd.s32 1, %s14
    $region7: #{tpu_custom_call.1} parent=1 // loop_footer_branch
      %13 = sbr.rel target = $region3
    $region8: #{tpu_custom_call.1} parent=1 // loop_exit
      _
    %420 = vsyncpa [#allocation3], 1
    %s421 = scalar_lea.sflag [#allocation3], 1
    %422 = vsyncpa %s421, 1
    %423 = vsyncpa [#allocation4], 1
    %s424 = scalar_lea.sflag [#allocation4], 1
    %425 = vsyncpa %s424, 1
    %426 = vsyncpa [#allocation5], 1
    %s427 = scalar_lea.sflag [#allocation5], 1
    %428 = vsyncpa %s427, 1

</llo_original>
